<compile_context>
chip_gen: v7x
topology: tpu7x:2x2x1
jax: 0.10.0
libtpu: 0.0.40
codegen_flags: <defaults>
</compile_context>

<pallas_src>
import functools
import math

import jax
import jax.numpy as jnp
from jax.experimental import pallas as pl
from jax.experimental.pallas import tpu as pltpu


# ----------------------------- helpers --------------------------------------
def _round_up(x, m):
    return ((x + m - 1) // m) * m


def _pad_cast(a, rows, cols, dtype):
    """Cast first (so any padded copy is at the narrow width), then zero-pad."""
    a = a.astype(dtype)
    r, c = a.shape
    if r != rows or c != cols:
        a = jnp.pad(a, ((0, rows - r), (0, cols - c)))
    return a


def _choose_tiles(n, tm, tk, f_p, c_p, cd_bytes, vmem_budget):
    """Pick (tm, tk, n_p): big tiles, bounded VMEM use, bounded n-padding overhead.

    tm / tk targets must be powers of two >= 128.
    """
    # -- VMEM guard: double-buffered inputs + resident f32 output + support temp --
    def est(tm_, tk_):
        return (2 * tm_ * tk_ * cd_bytes      # adjacency tiles (double buffered)
                + 2 * tk_ * c_p * cd_bytes    # X tiles
                + 2 * c_p * f_p * cd_bytes    # weight (resident)
                + 2 * tm_ * f_p * 4           # f32 output tile (accumulator)
                + tk_ * f_p * 4               # in-kernel support temp
                + 2 * f_p * 4)                # bias
    while est(tm, tk) > vmem_budget and tk > 128:
        tk //= 2
    while est(tm, tk) > vmem_budget and tm > 128:
        tm //= 2

    # -- cap tiles at the (128-aligned) problem size --
    n_128 = _round_up(n, 128)
    tm = min(tm, n_128)
    tk = min(tk, n_128)
    # keep the smaller tile an exact divisor of the larger one
    if tk >= tm:
        tk = max((tk // tm) * tm, tm)
    else:
        tm = max((tm // tk) * tk, tk)

    # -- shrink tiles only if padding n to a tile multiple would cost > ~25% bytes --
    while max(tm, tk) > 128 and (_round_up(n, max(tm, tk)) - n_128) > n_128 // 4:
        if tm >= tk and tm > 128:
            tm //= 2
        if tk > tm:
            tk //= 2

    n_p = _round_up(n, max(tm, tk))
    return tm, tk, n_p


# ----------------------------- kernel ---------------------------------------
def _graph_conv_kernel(x_ref, w_ref, adj_ref, b_ref, o_ref):
    """One (row-tile i, reduction-tile k) step of  out = adj @ (X @ W) + bias.

    The output block index ignores k, so o_ref stays VMEM-resident across the whole
    reduction axis and serves directly as the f32 accumulator.
    """
    k = pl.program_id(1)

    @pl.when(k == 0)
    def _init():
        o_ref[...] = jnp.zeros_like(o_ref)

    # support_k = X_k @ W : f32 MXU accumulation, then cast to the streaming dtype
    # (bf16 by default) so the second MXU pass runs at full rate.
    support = jnp.dot(
        x_ref[...], w_ref[...], preferred_element_type=jnp.float32
    ).astype(adj_ref.dtype)

    o_ref[...] += jnp.dot(
        adj_ref[...], support, preferred_element_type=jnp.float32
    )

    @pl.when(k == pl.num_programs(1) - 1)
    def _finalize():
        o_ref[...] += b_ref[...]          # (1, f_p) broadcasts over the row tile


# ----------------------------- wrapper --------------------------------------
@functools.partial(jax.jit, static_argnames=("tm", "tk", "compute_dtype"))
def graph_conv(x, adj, weight, bias=None, *, tm=512, tk=2048,
               compute_dtype=jnp.bfloat16):
    """out = adj @ (x @ weight) + bias   (GraphConv forward).

    tm / tk: output-row tile and reduction (adjacency-column) tile targets, powers of
    two >= 128. compute_dtype is the HBM/MXU streaming dtype for x / weight / adj;
    accumulation, bias and the output are always f32.
    """
    n, c_in = x.shape
    c_in_w, f_out = weight.shape
    assert c_in == c_in_w and adj.shape == (n, n)

    c_p = _round_up(c_in, 128)    # lane-dense X block / MXU K-dim of first matmul
    f_p = _round_up(f_out, 128)   # lane-dense output / MXU N-dim

    vmem_limit = 48 * 1024 * 1024            # fits v7x's 64 MiB VMEM with headroom
    cd_bytes = jnp.dtype(compute_dtype).itemsize
    tm, tk, n_p = _choose_tiles(n, tm, tk, f_p, c_p, cd_bytes,
                                vmem_budget=(3 * vmem_limit) // 4)

    x_p = _pad_cast(x, n_p, c_p, compute_dtype)
    w_p = _pad_cast(weight, c_p, f_p, compute_dtype)
    adj_p = _pad_cast(adj, n_p, n_p, compute_dtype)
    if bias is None:
        b_p = jnp.zeros((1, f_p), jnp.float32)
    else:
        b_p = _pad_cast(bias.reshape(1, f_out), 1, f_p, jnp.float32)

    out_p = pl.pallas_call(
        _graph_conv_kernel,
        out_shape=jax.ShapeDtypeStruct((n_p, f_p), jnp.float32),
        grid_spec=pltpu.PrefetchScalarGridSpec(
            num_scalar_prefetch=0,
            grid=(n_p // tm, n_p // tk),
            in_specs=[
                pl.BlockSpec((tk, c_p), lambda i, k: (k, 0)),    # X row block
                pl.BlockSpec((c_p, f_p), lambda i, k: (0, 0)),   # W (VMEM resident)
                pl.BlockSpec((tm, tk), lambda i, k: (i, k)),     # adjacency tile
                pl.BlockSpec((1, f_p), lambda i, k: (0, 0)),     # bias (resident)
            ],
            out_specs=pl.BlockSpec((tm, f_p), lambda i, k: (i, 0)),
        ),
        compiler_params=pltpu.CompilerParams(
            # TODO(synk): on v7x, if the trace shows one idle TensorCore, switch the
            # row axis to pltpu.CORE_PARALLEL (fp8 adjacency is a further v7x option).
            dimension_semantics=("parallel", "arbitrary"),
            vmem_limit_bytes=vmem_limit,
        ),
    )(x_p, w_p, adj_p, b_p)

    return out_p[:n, :f_out]


# ----------------------------- test / demo ----------------------------------
if __name__ == "__main__":
    key = jax.random.PRNGKey(0)
    k_x, k_adj, k_w, k_b = jax.random.split(key, 4)

    N, C_IN, C_OUT = 64, 32, 16

    x = jax.random.normal(k_x, (N, C_IN), dtype=jnp.float32)

    # random sparse graph + self loops, row-normalized like a GCN adjacency
    a = (jax.random.uniform(k_adj, (N, N)) < 0.15).astype(jnp.float32)
    a = jnp.maximum(a, a.T)
    a = jnp.maximum(a, jnp.eye(N, dtype=jnp.float32))
    adj = a / a.sum(axis=1, keepdims=True)

    # PyTorch reset_parameters: uniform(-stdv, stdv) with stdv = 1/sqrt(out_features)
    stdv = 1.0 / math.sqrt(C_OUT)
    w = jax.random.uniform(k_w, (C_IN, C_OUT), minval=-stdv, maxval=stdv,
                           dtype=jnp.float32)
    b = jax.random.uniform(k_b, (C_OUT,), minval=-stdv, maxval=stdv,
                           dtype=jnp.float32)

    ref = adj @ (x @ w) + b   # reference: out = adj @ (x @ w) + b

    # f32 streaming path: tight numerical check against the XLA reference.
    out_f32 = jax.block_until_ready(
        graph_conv(x, adj, w, b, compute_dtype=jnp.float32))
    assert out_f32.shape == (N, C_OUT)
    assert jnp.allclose(out_f32, ref, atol=1e-4, rtol=1e-4), "f32 path mismatch"

    # default perf path: bf16 HBM streaming of adj / x / w, f32 accumulation.
    out_bf16 = jax.block_until_ready(graph_conv(x, adj, w, b))
    assert out_bf16.shape == (N, C_OUT)
    assert jnp.allclose(out_bf16, ref, atol=5e-2, rtol=5e-2), "bf16 path mismatch"

    print("KERNEL_OK")
</pallas_src>

<mosaic_0001>
module attributes {stable_mosaic.version = 11 : i64} {
  func.func @_graph_conv_kernel(%arg0: i32, %arg1: i32, %arg2: memref<128x128xf32, #tpu.memory_space<vmem>>, %arg3: memref<128x128xf32, #tpu.memory_space<vmem>>, %arg4: memref<128x128xf32, #tpu.memory_space<vmem>>, %arg5: memref<1x128xf32, #tpu.memory_space<vmem>>, %arg6: memref<128x128xf32, #tpu.memory_space<vmem>>) attributes {dimension_semantics = [#tpu.dimension_semantics<parallel>, #tpu.dimension_semantics<arbitrary>], iteration_bounds = array<i64: 1, 1>, scalar_prefetch = 0 : i64, scratch_operands = 0 : i64, tpu.core_type = #tpu.core_type<tc>, window_params = [{transform_indices = @transform_0, window_bounds = array<i64: 128, 128>}, {pipeline_mode = #tpu.pipeline_mode<synchronous>, transform_indices = @transform_1, window_bounds = array<i64: 128, 128>}, {transform_indices = @transform_2, window_bounds = array<i64: 128, 128>}, {pipeline_mode = #tpu.pipeline_mode<synchronous>, transform_indices = @transform_3, window_bounds = array<i64: 1, 128>}, {transform_indices = @transform_4, window_bounds = array<i64: 128, 128>}]} {
    %c0_i32 = arith.constant 0 : i32
    %0 = arith.cmpi eq, %arg1, %c0_i32 : i32
    %1 = arith.extui %0 : i1 to i32
    %c0_i32_0 = arith.constant 0 : i32
    %2 = arith.cmpi ne, %1, %c0_i32_0 : i32
    scf.if %2 {
      %cst_13 = arith.constant 0.000000e+00 : f32
      %14 = vector.broadcast %cst_13 : f32 to vector<128x128xf32>
      %c0_14 = arith.constant 0 : index
      %c0_15 = arith.constant 0 : index
      %15 = vector.load %arg6[%c0_14, %c0_15] : memref<128x128xf32, #tpu.memory_space<vmem>>, vector<128x128xf32>
      tpu.vector_store %arg6[%c0_14, %c0_15], %14 {strides = array<i32>} : memref<128x128xf32, #tpu.memory_space<vmem>>, vector<128x128xf32>,
    } else {
    }
    %c0 = arith.constant 0 : index
    %c0_1 = arith.constant 0 : index
    %3 = vector.load %arg2[%c0, %c0_1] : memref<128x128xf32, #tpu.memory_space<vmem>>, vector<128x128xf32>
    %c0_2 = arith.constant 0 : index
    %c0_3 = arith.constant 0 : index
    %4 = vector.load %arg3[%c0_2, %c0_3] : memref<128x128xf32, #tpu.memory_space<vmem>>, vector<128x128xf32>
    %cst = arith.constant dense<0.000000e+00> : vector<128x128xf32>
    %5 = tpu.matmul %3, %4, %cst {dimension_numbers = #tpu.dot_dimension_numbers<[1], [0], [0], [1], [0, 0, 1, 1], [], []>} : vector<128x128xf32>, vector<128x128xf32>, vector<128x128xf32> -> vector<128x128xf32>
    %c0_4 = arith.constant 0 : index
    %c0_5 = arith.constant 0 : index
    %6 = vector.load %arg6[%c0_4, %c0_5] : memref<128x128xf32, #tpu.memory_space<vmem>>, vector<128x128xf32>
    %c0_6 = arith.constant 0 : index
    %c0_7 = arith.constant 0 : index
    %7 = vector.load %arg4[%c0_6, %c0_7] : memref<128x128xf32, #tpu.memory_space<vmem>>, vector<128x128xf32>
    %cst_8 = arith.constant dense<0.000000e+00> : vector<128x128xf32>
    %8 = tpu.matmul %7, %5, %cst_8 {dimension_numbers = #tpu.dot_dimension_numbers<[1], [0], [0], [1], [0, 0, 1, 1], [], []>} : vector<128x128xf32>, vector<128x128xf32>, vector<128x128xf32> -> vector<128x128xf32>
    %9 = arith.addf %6, %8 : vector<128x128xf32>
    %c0_9 = arith.constant 0 : index
    %c0_10 = arith.constant 0 : index
    %10 = vector.load %arg6[%c0_9, %c0_10] : memref<128x128xf32, #tpu.memory_space<vmem>>, vector<128x128xf32>
    tpu.vector_store %arg6[%c0_9, %c0_10], %9 {strides = array<i32>} : memref<128x128xf32, #tpu.memory_space<vmem>>, vector<128x128xf32>,
    %c0_i32_11 = arith.constant 0 : i32
    %11 = arith.cmpi eq, %arg1, %c0_i32_11 : i32
    %12 = arith.extui %11 : i1 to i32
    %c0_i32_12 = arith.constant 0 : i32
    %13 = arith.cmpi ne, %12, %c0_i32_12 : i32
    scf.if %13 {
      %c0_13 = arith.constant 0 : index
      %c0_14 = arith.constant 0 : index
      %14 = vector.load %arg6[%c0_13, %c0_14] : memref<128x128xf32, #tpu.memory_space<vmem>>, vector<128x128xf32>
      %c0_15 = arith.constant 0 : index
      %c0_16 = arith.constant 0 : index
      %15 = vector.load %arg5[%c0_15, %c0_16] : memref<1x128xf32, #tpu.memory_space<vmem>>, vector<1x128xf32>
      %16 = vector.broadcast %15 : vector<1x128xf32> to vector<128x128xf32>
      %17 = arith.addf %14, %16 : vector<128x128xf32>
      %c0_17 = arith.constant 0 : index
      %c0_18 = arith.constant 0 : index
      %18 = vector.load %arg6[%c0_17, %c0_18] : memref<128x128xf32, #tpu.memory_space<vmem>>, vector<128x128xf32>
      tpu.vector_store %arg6[%c0_17, %c0_18], %17 {strides = array<i32>} : memref<128x128xf32, #tpu.memory_space<vmem>>, vector<128x128xf32>,
    } else {
    }
    return
  }
  func.func @transform_0(%arg0: i32, %arg1: i32) -> (i32, i32) {
    %c0_i32 = arith.constant 0 : i32
    %c0_i32_0 = arith.constant 0 : i32
    return %arg1, %c0_i32 : i32, i32
  }
  func.func @transform_1(%arg0: i32, %arg1: i32) -> (i32, i32) {
    %c0_i32 = arith.constant 0 : i32
    %c0_i32_0 = arith.constant 0 : i32
    %c0_i32_1 = arith.constant 0 : i32
    return %c0_i32, %c0_i32_0 : i32, i32
  }
  func.func @transform_2(%arg0: i32, %arg1: i32) -> (i32, i32) {
    %c0_i32 = arith.constant 0 : i32
    return %arg0, %arg1 : i32, i32
  }
  func.func @transform_3(%arg0: i32, %arg1: i32) -> (i32, i32) {
    %c0_i32 = arith.constant 0 : i32
    %c0_i32_0 = arith.constant 0 : i32
    %c0_i32_1 = arith.constant 0 : i32
    return %c0_i32, %c0_i32_0 : i32, i32
  }
  func.func @transform_4(%arg0: i32, %arg1: i32) -> (i32, i32) {
    %c0_i32 = arith.constant 0 : i32
    %c0_i32_0 = arith.constant 0 : i32
    return %arg0, %c0_i32 : i32, i32
  }
}

</mosaic_0001>

<llo_original>
// kernel: graph_conv.1
$region0: #{graph_conv.1}
  #allocation0 [shape = 'u32[]', space=smem, size = 0x4, offset = 0x4, fixed_abs, tag = 'smem constant byte address 0x4 - core index']
  #allocation1 [shape = 'u32[144,128]{1,0:T(1,128)}', space=vmem, size = 0x12000, scoped, tag = 'internal scratch']
  %s0 = inlined_call_operand.vmem [shape: f32[128,128], index: 0, kind: input, shape index: {}]
  %s1 = inlined_call_operand.vmem [shape: f32[128,128], index: 1, kind: input, shape index: {}]
  %s2 = inlined_call_operand.vmem [shape: f32[128,128], index: 2, kind: input, shape index: {}]
  %s3 = inlined_call_operand.vmem [shape: f32[1,128], index: 3, kind: input, shape index: {}]
  %s4 = inlined_call_operand.vmem [shape: f32[128,128], index: 4, kind: output, shape index: {}]
  %s5 = sld [smem:[#allocation0]]
  $region34: #{graph_conv.1} parent=0
    _
  %s7 = ssub.s32 1, %s5
  %s8 = scalar_select 0, %s7, %s5
  // Predicated region
  $region2: #{graph_conv.1} parent=0 // pred_check
    _
  $region3: #{graph_conv.1} parent=0 // pred_check_branch
    %10 = sbr.rel (0) target = $region5
  $region4: #{graph_conv.1} parent=0 // pred_region
    _
  $region5: #{graph_conv.1} parent=0 // pred_fallthru
    _
  // Predicated region
  $region6: #{graph_conv.1} parent=0 // pred_check
    _
  $region7: #{graph_conv.1} parent=0 // pred_check_branch
    %12 = sbr.rel (0) target = $region9
  $region8: #{graph_conv.1} parent=0 // pred_region
    _
  $region9: #{graph_conv.1} parent=0 // pred_fallthru
    _
  // Predicated region
  $region10: #{graph_conv.1} parent=0 // pred_check
    _
  $region11: #{graph_conv.1} parent=0 // pred_check_branch
    %14 = sbr.rel (0) target = $region13
  $region12: #{graph_conv.1} parent=0 // pred_region
    _
  $region13: #{graph_conv.1} parent=0 // pred_fallthru
    _
  // Predicated region
  $region14: #{graph_conv.1} parent=0 // pred_check
    _
  $region15: #{graph_conv.1} parent=0 // pred_check_branch
    %16 = sbr.rel (0) target = $region17
  $region16: #{graph_conv.1} parent=0 // pred_region
    _
  $region17: #{graph_conv.1} parent=0 // pred_fallthru
    _
  %p17 = scmp.eq.s32.totalorder 0, 0
  // Predicated region
  $region18: #{graph_conv.1} parent=0 // pred_check
    %p18 = pneg %p17
  $region19: #{graph_conv.1} parent=0 // pred_check_branch
    %20 = sbr.rel (%p18) target = $region21
  $region20: #{graph_conv.1} parent=0 // pred_region
    %21 = vst [vmem:[%s4] sm:$0xff] 0.0
    %22 = vst [vmem:[%s4 + $0x8] sm:$0xff] 0.0
    %23 = vst [vmem:[%s4 + $0x10] sm:$0xff] 0.0
    %24 = vst [vmem:[%s4 + $0x18] sm:$0xff] 0.0
    %25 = vst [vmem:[%s4 + $0x20] sm:$0xff] 0.0
    %26 = vst [vmem:[%s4 + $0x28] sm:$0xff] 0.0
    %27 = vst [vmem:[%s4 + $0x30] sm:$0xff] 0.0
    %28 = vst [vmem:[%s4 + $0x38] sm:$0xff] 0.0
    %29 = vst [vmem:[%s4 + $0x40] sm:$0xff] 0.0
    %30 = vst [vmem:[%s4 + $0x48] sm:$0xff] 0.0
    %31 = vst [vmem:[%s4 + $0x50] sm:$0xff] 0.0
    %32 = vst [vmem:[%s4 + $0x58] sm:$0xff] 0.0
    %33 = vst [vmem:[%s4 + $0x60] sm:$0xff] 0.0
    %34 = vst [vmem:[%s4 + $0x68] sm:$0xff] 0.0
    %35 = vst [vmem:[%s4 + $0x70] sm:$0xff] 0.0
    %36 = vst [vmem:[%s4 + $0x78] sm:$0xff] 0.0
  $region21: #{graph_conv.1} parent=0 // pred_fallthru
    _
  %v37 = vld [vmem:[%s0] sm:$0xff]
  %v38 = vld [vmem:[%s0 + $0x8] sm:$0xff]
  %v39 = vld [vmem:[%s0 + $0x10] sm:$0xff]
  %v40 = vld [vmem:[%s0 + $0x18] sm:$0xff]
  %v41 = vld [vmem:[%s0 + $0x20] sm:$0xff]
  %v42 = vld [vmem:[%s0 + $0x28] sm:$0xff]
  %v43 = vld [vmem:[%s0 + $0x30] sm:$0xff]
  %v44 = vld [vmem:[%s0 + $0x38] sm:$0xff]
  %v45 = vld [vmem:[%s0 + $0x40] sm:$0xff]
  %v46 = vld [vmem:[%s0 + $0x48] sm:$0xff]
  %v47 = vld [vmem:[%s0 + $0x50] sm:$0xff]
  %v48 = vld [vmem:[%s0 + $0x58] sm:$0xff]
  %v49 = vld [vmem:[%s0 + $0x60] sm:$0xff]
  %v50 = vld [vmem:[%s0 + $0x68] sm:$0xff]
  %v51 = vld [vmem:[%s0 + $0x70] sm:$0xff]
  %v52 = vld [vmem:[%s0 + $0x78] sm:$0xff]
  %v53 = vld [vmem:[%s1] sm:$0xff]
  %v54 = vld [vmem:[%s1 + $0x8] sm:$0xff]
  %v55 = vld [vmem:[%s1 + $0x10] sm:$0xff]
  %v56 = vld [vmem:[%s1 + $0x18] sm:$0xff]
  %v57 = vld [vmem:[%s1 + $0x20] sm:$0xff]
  %v58 = vld [vmem:[%s1 + $0x28] sm:$0xff]
  %v59 = vld [vmem:[%s1 + $0x30] sm:$0xff]
  %v60 = vld [vmem:[%s1 + $0x38] sm:$0xff]
  %v61 = vld [vmem:[%s1 + $0x40] sm:$0xff]
  %v62 = vld [vmem:[%s1 + $0x48] sm:$0xff]
  %v63 = vld [vmem:[%s1 + $0x50] sm:$0xff]
  %v64 = vld [vmem:[%s1 + $0x58] sm:$0xff]
  %v65 = vld [vmem:[%s1 + $0x60] sm:$0xff]
  %v66 = vld [vmem:[%s1 + $0x68] sm:$0xff]
  %v67 = vld [vmem:[%s1 + $0x70] sm:$0xff]
  %v68 = vld [vmem:[%s1 + $0x78] sm:$0xff]
  %69 = vmatprep.subr.mxu0 0.0
  %70 = vmatpush1.msra.mxu0 %v53
  %71 = vmatprep.subr.mxu0 0.0
  %72 = vmatpush1.msra.mxu0 %v54
  %73 = vmatprep.subr.mxu0 0.0
  %74 = vmatpush1.msra.mxu0 %v55
  %75 = vmatprep.subr.mxu0 0.0
  %76 = vmatpush1.msra.mxu0 %v56
  %77 = vmatprep.subr.mxu0 0.0
  %78 = vmatpush1.msra.mxu0 %v57
  %79 = vmatprep.subr.mxu0 0.0
  %80 = vmatpush1.msra.mxu0 %v58
  %81 = vmatprep.subr.mxu0 0.0
  %82 = vmatpush1.msra.mxu0 %v59
  %83 = vmatprep.subr.mxu0 0.0
  %84 = vmatpush1.msra.mxu0 %v60
  %85 = vmatprep.subr.mxu0 0.0
  %86 = vmatpush1.msra.mxu0 %v61
  %87 = vmatprep.subr.mxu0 0.0
  %88 = vmatpush1.msra.mxu0 %v62
  %89 = vmatprep.subr.mxu0 0.0
  %90 = vmatpush1.msra.mxu0 %v63
  %91 = vmatprep.subr.mxu0 0.0
  %92 = vmatpush1.msra.mxu0 %v64
  %93 = vmatprep.subr.mxu0 0.0
  %94 = vmatpush1.msra.mxu0 %v65
  %95 = vmatprep.subr.mxu0 0.0
  %96 = vmatpush1.msra.mxu0 %v66
  %97 = vmatprep.subr.mxu0 0.0
  %98 = vmatpush1.msra.mxu0 %v67
  %99 = vmatprep.subr.mxu0 0.0
  %100 = vmatpush1.msra.mxu0 %v68
  %101 = vmatprep.subr.mxu0 0.0
  %102 = vmatpush1.msra.mxu0 0.0
  %103 = vmatprep.subr.mxu0 0.0
  %104 = vmatpush1.msra.mxu0 0.0
  %105 = vmatprep.subr.mxu0 0.0
  %106 = vmatpush1.msra.mxu0 0.0
  %107 = vmatprep.subr.mxu0 0.0
  %108 = vmatpush1.msra.mxu0 0.0
  %109 = vmatprep.subr.mxu0 0.0
  %110 = vmatpush1.msra.mxu0 0.0
  %111 = vmatprep.subr.mxu0 0.0
  %112 = vmatpush1.msra.mxu0 0.0
  %113 = vmatprep.subr.mxu0 0.0
  %114 = vmatpush1.msra.mxu0 0.0
  %115 = vmatprep.subr.mxu0 0.0
  %116 = vmatpush1.msra.mxu0 0.0
  %117 = vmatprep.subr.mxu0 0.0
  %118 = vmatpush1.msra.mxu0 0.0
  %119 = vmatprep.subr.mxu0 0.0
  %120 = vmatpush1.msra.mxu0 0.0
  %121 = vmatprep.subr.mxu0 0.0
  %122 = vmatpush1.msra.mxu0 0.0
  %123 = vmatprep.subr.mxu0 0.0
  %124 = vmatpush1.msra.mxu0 0.0
  %125 = vmatprep.subr.mxu0 0.0
  %126 = vmatpush1.msra.mxu0 0.0
  %127 = vmatprep.subr.mxu0 0.0
  %128 = vmatpush1.msra.mxu0 0.0
  %129 = vmatprep.subr.mxu0 0.0
  %130 = vmatpush1.msra.mxu0 0.0
  %131 = vmatprep.subr.mxu0 0.0
  %132 = vmatpush1.msra.mxu0 0.0
  %133 = vmatprep.mubr.f32.mxu0 0.0
  %134 = vmatmul.mubr.f32.gmra.mrb[0].mxu0 %v37
  %v135 = vpop.f32.mrb[0].mxu0
  %v136 = vadd.f32 0.0, %v135
  %v137 = vpop.f32.mrb[0].mxu0
  %138 = vmatprep.mubr.f32.mxu0 0.0
  %139 = vmatmul.mubr.f32.gmra.mrb[0].mxu0 %v38
  %v140 = vpop.f32.mrb[0].mxu0
  %v141 = vadd.f32 0.0, %v140
  %v142 = vpop.f32.mrb[0].mxu0
  %143 = vmatprep.mubr.f32.mxu0 0.0
  %144 = vmatmul.mubr.f32.gmra.mrb[0].mxu0 %v39
  %v145 = vpop.f32.mrb[0].mxu0
  %v146 = vadd.f32 0.0, %v145
  %v147 = vpop.f32.mrb[0].mxu0
  %148 = vmatprep.mubr.f32.mxu0 0.0
  %149 = vmatmul.mubr.f32.gmra.mrb[0].mxu0 %v40
  %v150 = vpop.f32.mrb[0].mxu0
  %v151 = vadd.f32 0.0, %v150
  %v152 = vpop.f32.mrb[0].mxu0
  %153 = vmatprep.mubr.f32.mxu0 0.0
  %154 = vmatmul.mubr.f32.gmra.mrb[0].mxu0 %v41
  %v155 = vpop.f32.mrb[0].mxu0
  %v156 = vadd.f32 0.0, %v155
  %v157 = vpop.f32.mrb[0].mxu0
  %158 = vmatprep.mubr.f32.mxu0 0.0
  %159 = vmatmul.mubr.f32.gmra.mrb[0].mxu0 %v42
  %v160 = vpop.f32.mrb[0].mxu0
  %v161 = vadd.f32 0.0, %v160
  %v162 = vpop.f32.mrb[0].mxu0
  %163 = vmatprep.mubr.f32.mxu0 0.0
  %164 = vmatmul.mubr.f32.gmra.mrb[0].mxu0 %v43
  %v165 = vpop.f32.mrb[0].mxu0
  %v166 = vadd.f32 0.0, %v165
  %v167 = vpop.f32.mrb[0].mxu0
  %168 = vmatprep.mubr.f32.mxu0 0.0
  %169 = vmatmul.mubr.f32.gmra.mrb[0].mxu0 %v44
  %v170 = vpop.f32.mrb[0].mxu0
  %v171 = vadd.f32 0.0, %v170
  %v172 = vpop.f32.mrb[0].mxu0
  %173 = vmatprep.mubr.f32.mxu0 0.0
  %174 = vmatmul.mubr.f32.gmra.mrb[0].mxu0 %v45
  %v175 = vpop.f32.mrb[0].mxu0
  %v176 = vadd.f32 0.0, %v175
  %v177 = vpop.f32.mrb[0].mxu0
  %178 = vmatprep.mubr.f32.mxu0 0.0
  %179 = vmatmul.mubr.f32.gmra.mrb[0].mxu0 %v46
  %v180 = vpop.f32.mrb[0].mxu0
  %v181 = vadd.f32 0.0, %v180
  %v182 = vpop.f32.mrb[0].mxu0
  %183 = vmatprep.mubr.f32.mxu0 0.0
  %184 = vmatmul.mubr.f32.gmra.mrb[0].mxu0 %v47
  %v185 = vpop.f32.mrb[0].mxu0
  %v186 = vadd.f32 0.0, %v185
  %v187 = vpop.f32.mrb[0].mxu0
  %188 = vmatprep.mubr.f32.mxu0 0.0
  %189 = vmatmul.mubr.f32.gmra.mrb[0].mxu0 %v48
  %v190 = vpop.f32.mrb[0].mxu0
  %v191 = vadd.f32 0.0, %v190
  %v192 = vpop.f32.mrb[0].mxu0
  %193 = vmatprep.mubr.f32.mxu0 0.0
  %194 = vmatmul.mubr.f32.gmra.mrb[0].mxu0 %v49
  %v195 = vpop.f32.mrb[0].mxu0
  %v196 = vadd.f32 0.0, %v195
  %v197 = vpop.f32.mrb[0].mxu0
  %198 = vmatprep.mubr.f32.mxu0 0.0
  %199 = vmatmul.mubr.f32.gmra.mrb[0].mxu0 %v50
  %v200 = vpop.f32.mrb[0].mxu0
  %v201 = vadd.f32 0.0, %v200
  %v202 = vpop.f32.mrb[0].mxu0
  %203 = vmatprep.mubr.f32.mxu0 0.0
  %204 = vmatmul.mubr.f32.gmra.mrb[0].mxu0 %v51
  %v205 = vpop.f32.mrb[0].mxu0
  %v206 = vadd.f32 0.0, %v205
  %v207 = vpop.f32.mrb[0].mxu0
  %208 = vmatprep.mubr.f32.mxu0 0.0
  %209 = vmatmul.mubr.f32.gmra.mrb[0].mxu0 %v52
  %v210 = vpop.f32.mrb[0].mxu0
  %v211 = vadd.f32 0.0, %v210
  %v212 = vpop.f32.mrb[0].mxu0
  %213 = vdwg.mxu0
  %v214 = vld [vmem:[%s4] sm:$0xff]
  %v215 = vld [vmem:[%s4 + $0x8] sm:$0xff]
  %v216 = vld [vmem:[%s4 + $0x10] sm:$0xff]
  %v217 = vld [vmem:[%s4 + $0x18] sm:$0xff]
  %v218 = vld [vmem:[%s4 + $0x20] sm:$0xff]
  %v219 = vld [vmem:[%s4 + $0x28] sm:$0xff]
  %v220 = vld [vmem:[%s4 + $0x30] sm:$0xff]
  %v221 = vld [vmem:[%s4 + $0x38] sm:$0xff]
  %v222 = vld [vmem:[%s4 + $0x40] sm:$0xff]
  %v223 = vld [vmem:[%s4 + $0x48] sm:$0xff]
  %v224 = vld [vmem:[%s4 + $0x50] sm:$0xff]
  %v225 = vld [vmem:[%s4 + $0x58] sm:$0xff]
  %v226 = vld [vmem:[%s4 + $0x60] sm:$0xff]
  %v227 = vld [vmem:[%s4 + $0x68] sm:$0xff]
  %v228 = vld [vmem:[%s4 + $0x70] sm:$0xff]
  %v229 = vld [vmem:[%s4 + $0x78] sm:$0xff]
  %v230 = vld [vmem:[%s2] sm:$0xff]
  %v231 = vld [vmem:[%s2 + $0x8] sm:$0xff]
  %v232 = vld [vmem:[%s2 + $0x10] sm:$0xff]
  %v233 = vld [vmem:[%s2 + $0x18] sm:$0xff]
  %v234 = vld [vmem:[%s2 + $0x20] sm:$0xff]
  %v235 = vld [vmem:[%s2 + $0x28] sm:$0xff]
  %v236 = vld [vmem:[%s2 + $0x30] sm:$0xff]
  %v237 = vld [vmem:[%s2 + $0x38] sm:$0xff]
  %v238 = vld [vmem:[%s2 + $0x40] sm:$0xff]
  %v239 = vld [vmem:[%s2 + $0x48] sm:$0xff]
  %v240 = vld [vmem:[%s2 + $0x50] sm:$0xff]
  %v241 = vld [vmem:[%s2 + $0x58] sm:$0xff]
  %v242 = vld [vmem:[%s2 + $0x60] sm:$0xff]
  %v243 = vld [vmem:[%s2 + $0x68] sm:$0xff]
  %v244 = vld [vmem:[%s2 + $0x70] sm:$0xff]
  %v245 = vld [vmem:[%s2 + $0x78] sm:$0xff]
  %246 = vmatprep.subr.mxu0 0.0
  %247 = vmatpush1.msra.mxu0 %v136
  %248 = vmatprep.subr.mxu0 0.0
  %249 = vmatpush1.msra.mxu0 %v141
  %250 = vmatprep.subr.mxu0 0.0
  %251 = vmatpush1.msra.mxu0 %v146
  %252 = vmatprep.subr.mxu0 0.0
  %253 = vmatpush1.msra.mxu0 %v151
  %254 = vmatprep.subr.mxu0 0.0
  %255 = vmatpush1.msra.mxu0 %v156
  %256 = vmatprep.subr.mxu0 0.0
  %257 = vmatpush1.msra.mxu0 %v161
  %258 = vmatprep.subr.mxu0 0.0
  %259 = vmatpush1.msra.mxu0 %v166
  %260 = vmatprep.subr.mxu0 0.0
  %261 = vmatpush1.msra.mxu0 %v171
  %262 = vmatprep.subr.mxu0 0.0
  %263 = vmatpush1.msra.mxu0 %v176
  %264 = vmatprep.subr.mxu0 0.0
  %265 = vmatpush1.msra.mxu0 %v181
  %266 = vmatprep.subr.mxu0 0.0
  %267 = vmatpush1.msra.mxu0 %v186
  %268 = vmatprep.subr.mxu0 0.0
  %269 = vmatpush1.msra.mxu0 %v191
  %270 = vmatprep.subr.mxu0 0.0
  %271 = vmatpush1.msra.mxu0 %v196
  %272 = vmatprep.subr.mxu0 0.0
  %273 = vmatpush1.msra.mxu0 %v201
  %274 = vmatprep.subr.mxu0 0.0
  %275 = vmatpush1.msra.mxu0 %v206
  %276 = vmatprep.subr.mxu0 0.0
  %277 = vmatpush1.msra.mxu0 %v211
  %278 = vmatprep.subr.mxu0 0.0
  %279 = vmatpush1.msra.mxu0 0.0
  %280 = vmatprep.subr.mxu0 0.0
  %281 = vmatpush1.msra.mxu0 0.0
  %282 = vmatprep.subr.mxu0 0.0
  %283 = vmatpush1.msra.mxu0 0.0
  %284 = vmatprep.subr.mxu0 0.0
  %285 = vmatpush1.msra.mxu0 0.0
  %286 = vmatprep.subr.mxu0 0.0
  %287 = vmatpush1.msra.mxu0 0.0
  %288 = vmatprep.subr.mxu0 0.0
  %289 = vmatpush1.msra.mxu0 0.0
  %290 = vmatprep.subr.mxu0 0.0
  %291 = vmatpush1.msra.mxu0 0.0
  %292 = vmatprep.subr.mxu0 0.0
  %293 = vmatpush1.msra.mxu0 0.0
  %294 = vmatprep.subr.mxu0 0.0
  %295 = vmatpush1.msra.mxu0 0.0
  %296 = vmatprep.subr.mxu0 0.0
  %297 = vmatpush1.msra.mxu0 0.0
  %298 = vmatprep.subr.mxu0 0.0
  %299 = vmatpush1.msra.mxu0 0.0
  %300 = vmatprep.subr.mxu0 0.0
  %301 = vmatpush1.msra.mxu0 0.0
  %302 = vmatprep.subr.mxu0 0.0
  %303 = vmatpush1.msra.mxu0 0.0
  %304 = vmatprep.subr.mxu0 0.0
  %305 = vmatpush1.msra.mxu0 0.0
  %306 = vmatprep.subr.mxu0 0.0
  %307 = vmatpush1.msra.mxu0 0.0
  %308 = vmatprep.subr.mxu0 0.0
  %309 = vmatpush1.msra.mxu0 0.0
  %310 = vmatprep.mubr.f32.mxu0 0.0
  %311 = vmatmul.mubr.f32.gmra.mrb[0].mxu0 %v230
  %v312 = vpop.f32.mrb[0].mxu0
  %v313 = vadd.f32 0.0, %v312
  %v314 = vpop.f32.mrb[0].mxu0
  %315 = vmatprep.mubr.f32.mxu0 0.0
  %316 = vmatmul.mubr.f32.gmra.mrb[0].mxu0 %v231
  %v317 = vpop.f32.mrb[0].mxu0
  %v318 = vadd.f32 0.0, %v317
  %v319 = vpop.f32.mrb[0].mxu0
  %320 = vmatprep.mubr.f32.mxu0 0.0
  %321 = vmatmul.mubr.f32.gmra.mrb[0].mxu0 %v232
  %v322 = vpop.f32.mrb[0].mxu0
  %v323 = vadd.f32 0.0, %v322
  %v324 = vpop.f32.mrb[0].mxu0
  %325 = vmatprep.mubr.f32.mxu0 0.0
  %326 = vmatmul.mubr.f32.gmra.mrb[0].mxu0 %v233
  %v327 = vpop.f32.mrb[0].mxu0
  %v328 = vadd.f32 0.0, %v327
  %v329 = vpop.f32.mrb[0].mxu0
  %330 = vmatprep.mubr.f32.mxu0 0.0
  %331 = vmatmul.mubr.f32.gmra.mrb[0].mxu0 %v234
  %v332 = vpop.f32.mrb[0].mxu0
  %v333 = vadd.f32 0.0, %v332
  %v334 = vpop.f32.mrb[0].mxu0
  %335 = vmatprep.mubr.f32.mxu0 0.0
  %336 = vmatmul.mubr.f32.gmra.mrb[0].mxu0 %v235
  %v337 = vpop.f32.mrb[0].mxu0
  %v338 = vadd.f32 0.0, %v337
  %v339 = vpop.f32.mrb[0].mxu0
  %340 = vmatprep.mubr.f32.mxu0 0.0
  %341 = vmatmul.mubr.f32.gmra.mrb[0].mxu0 %v236
  %v342 = vpop.f32.mrb[0].mxu0
  %v343 = vadd.f32 0.0, %v342
  %v344 = vpop.f32.mrb[0].mxu0
  %345 = vmatprep.mubr.f32.mxu0 0.0
  %346 = vmatmul.mubr.f32.gmra.mrb[0].mxu0 %v237
  %v347 = vpop.f32.mrb[0].mxu0
  %v348 = vadd.f32 0.0, %v347
  %v349 = vpop.f32.mrb[0].mxu0
  %350 = vmatprep.mubr.f32.mxu0 0.0
  %351 = vmatmul.mubr.f32.gmra.mrb[0].mxu0 %v238
  %v352 = vpop.f32.mrb[0].mxu0
  %v353 = vadd.f32 0.0, %v352
  %v354 = vpop.f32.mrb[0].mxu0
  %355 = vmatprep.mubr.f32.mxu0 0.0
  %356 = vmatmul.mubr.f32.gmra.mrb[0].mxu0 %v239
  %v357 = vpop.f32.mrb[0].mxu0
  %v358 = vadd.f32 0.0, %v357
  %v359 = vpop.f32.mrb[0].mxu0
  %360 = vmatprep.mubr.f32.mxu0 0.0
  %361 = vmatmul.mubr.f32.gmra.mrb[0].mxu0 %v240
  %v362 = vpop.f32.mrb[0].mxu0
  %v363 = vadd.f32 0.0, %v362
  %v364 = vpop.f32.mrb[0].mxu0
  %365 = vmatprep.mubr.f32.mxu0 0.0
  %366 = vmatmul.mubr.f32.gmra.mrb[0].mxu0 %v241
  %v367 = vpop.f32.mrb[0].mxu0
  %v368 = vadd.f32 0.0, %v367
  %v369 = vpop.f32.mrb[0].mxu0
  %370 = vmatprep.mubr.f32.mxu0 0.0
  %371 = vmatmul.mubr.f32.gmra.mrb[0].mxu0 %v242
  %v372 = vpop.f32.mrb[0].mxu0
  %v373 = vadd.f32 0.0, %v372
  %v374 = vpop.f32.mrb[0].mxu0
  %375 = vmatprep.mubr.f32.mxu0 0.0
  %376 = vmatmul.mubr.f32.gmra.mrb[0].mxu0 %v243
  %v377 = vpop.f32.mrb[0].mxu0
  %v378 = vadd.f32 0.0, %v377
  %v379 = vpop.f32.mrb[0].mxu0
  %380 = vmatprep.mubr.f32.mxu0 0.0
  %381 = vmatmul.mubr.f32.gmra.mrb[0].mxu0 %v244
  %v382 = vpop.f32.mrb[0].mxu0
  %v383 = vadd.f32 0.0, %v382
  %v384 = vpop.f32.mrb[0].mxu0
  %385 = vmatprep.mubr.f32.mxu0 0.0
  %386 = vmatmul.mubr.f32.gmra.mrb[0].mxu0 %v245
  %v387 = vpop.f32.mrb[0].mxu0
  %v388 = vadd.f32 0.0, %v387
  %v389 = vpop.f32.mrb[0].mxu0
  %390 = vdwg.mxu0
  %v391 = vadd.f32 %v214, %v313
  %v392 = vadd.f32 %v215, %v318
  %v393 = vadd.f32 %v216, %v323
  %v394 = vadd.f32 %v217, %v328
  %v395 = vadd.f32 %v218, %v333
  %v396 = vadd.f32 %v219, %v338
  %v397 = vadd.f32 %v220, %v343
  %v398 = vadd.f32 %v221, %v348
  %v399 = vadd.f32 %v222, %v353
  %v400 = vadd.f32 %v223, %v358
  %v401 = vadd.f32 %v224, %v363
  %v402 = vadd.f32 %v225, %v368
  %v403 = vadd.f32 %v226, %v373
  %v404 = vadd.f32 %v227, %v378
  %v405 = vadd.f32 %v228, %v383
  %v406 = vadd.f32 %v229, %v388
  %407 = vst [vmem:[%s4] sm:$0xff] %v391
  %408 = vst [vmem:[%s4 + $0x8] sm:$0xff] %v392
  %409 = vst [vmem:[%s4 + $0x10] sm:$0xff] %v393
  %410 = vst [vmem:[%s4 + $0x18] sm:$0xff] %v394
  %411 = vst [vmem:[%s4 + $0x20] sm:$0xff] %v395
  %412 = vst [vmem:[%s4 + $0x28] sm:$0xff] %v396
  %413 = vst [vmem:[%s4 + $0x30] sm:$0xff] %v397
  %414 = vst [vmem:[%s4 + $0x38] sm:$0xff] %v398
  %415 = vst [vmem:[%s4 + $0x40] sm:$0xff] %v399
  %416 = vst [vmem:[%s4 + $0x48] sm:$0xff] %v400
  %417 = vst [vmem:[%s4 + $0x50] sm:$0xff] %v401
  %418 = vst [vmem:[%s4 + $0x58] sm:$0xff] %v402
  %419 = vst [vmem:[%s4 + $0x60] sm:$0xff] %v403
  %420 = vst [vmem:[%s4 + $0x68] sm:$0xff] %v404
  %421 = vst [vmem:[%s4 + $0x70] sm:$0xff] %v405
  %422 = vst [vmem:[%s4 + $0x78] sm:$0xff] %v406
  // Predicated region
  $region22: #{graph_conv.1} parent=0 // pred_check
    %p423 = pneg %p17
  $region23: #{graph_conv.1} parent=0 // pred_check_branch
    %425 = sbr.rel (%p423) target = $region25
  $region24: #{graph_conv.1} parent=0 // pred_region
    %v426 = vld [vmem:[%s4] sm:$0xff]
    %v427 = vld [vmem:[%s4 + $0x8] sm:$0xff]
    %v428 = vld [vmem:[%s4 + $0x10] sm:$0xff]
    %v429 = vld [vmem:[%s4 + $0x18] sm:$0xff]
    %v430 = vld [vmem:[%s4 + $0x20] sm:$0xff]
    %v431 = vld [vmem:[%s4 + $0x28] sm:$0xff]
    %v432 = vld [vmem:[%s4 + $0x30] sm:$0xff]
    %v433 = vld [vmem:[%s4 + $0x38] sm:$0xff]
    %v434 = vld [vmem:[%s4 + $0x40] sm:$0xff]
    %v435 = vld [vmem:[%s4 + $0x48] sm:$0xff]
    %v436 = vld [vmem:[%s4 + $0x50] sm:$0xff]
    %v437 = vld [vmem:[%s4 + $0x58] sm:$0xff]
    %v438 = vld [vmem:[%s4 + $0x60] sm:$0xff]
    %v439 = vld [vmem:[%s4 + $0x68] sm:$0xff]
    %v440 = vld [vmem:[%s4 + $0x70] sm:$0xff]
    %v441 = vld [vmem:[%s4 + $0x78] sm:$0xff]
    %v442 = vld [vmem:[%s3] sm:$0x1]
    %v444 = vlaneseq
    %v445 = vshrl.u32 %v444, 7
    %v446 = vsub.s32 0, %v445
    %v447 = vrot.slane %v442, %v446
    %v449 = vadd.f32 %v426, %v447
    %v450 = vadd.f32 %v427, %v447
    %v451 = vadd.f32 %v428, %v447
    %v452 = vadd.f32 %v429, %v447
    %v453 = vadd.f32 %v430, %v447
    %v454 = vadd.f32 %v431, %v447
    %v455 = vadd.f32 %v432, %v447
    %v456 = vadd.f32 %v433, %v447
    %v457 = vadd.f32 %v434, %v447
    %v458 = vadd.f32 %v435, %v447
    %v459 = vadd.f32 %v436, %v447
    %v460 = vadd.f32 %v437, %v447
    %v461 = vadd.f32 %v438, %v447
    %v462 = vadd.f32 %v439, %v447
    %v463 = vadd.f32 %v440, %v447
    %v464 = vadd.f32 %v441, %v447
    %465 = vst [vmem:[%s4] sm:$0xff] %v449
    %466 = vst [vmem:[%s4 + $0x8] sm:$0xff] %v450
    %467 = vst [vmem:[%s4 + $0x10] sm:$0xff] %v451
    %468 = vst [vmem:[%s4 + $0x18] sm:$0xff] %v452
    %469 = vst [vmem:[%s4 + $0x20] sm:$0xff] %v453
    %470 = vst [vmem:[%s4 + $0x28] sm:$0xff] %v454
    %471 = vst [vmem:[%s4 + $0x30] sm:$0xff] %v455
    %472 = vst [vmem:[%s4 + $0x38] sm:$0xff] %v456
    %473 = vst [vmem:[%s4 + $0x40] sm:$0xff] %v457
    %474 = vst [vmem:[%s4 + $0x48] sm:$0xff] %v458
    %475 = vst [vmem:[%s4 + $0x50] sm:$0xff] %v459
    %476 = vst [vmem:[%s4 + $0x58] sm:$0xff] %v460
    %477 = vst [vmem:[%s4 + $0x60] sm:$0xff] %v461
    %478 = vst [vmem:[%s4 + $0x68] sm:$0xff] %v462
    %479 = vst [vmem:[%s4 + $0x70] sm:$0xff] %v463
    %480 = vst [vmem:[%s4 + $0x78] sm:$0xff] %v464
  $region25: #{graph_conv.1} parent=0 // pred_fallthru
    _
  // Predicated region
  $region26: #{graph_conv.1} parent=0 // pred_check
    _
  $region27: #{graph_conv.1} parent=0 // pred_check_branch
    %482 = sbr.rel (0) target = $region29
  $region28: #{graph_conv.1} parent=0 // pred_region
    _
  $region29: #{graph_conv.1} parent=0 // pred_fallthru
    _
  // Predicated region
  $region30: #{graph_conv.1} parent=0 // pred_check
    _
  $region31: #{graph_conv.1} parent=0 // pred_check_branch
    %484 = sbr.rel (0) target = $region33
  $region32: #{graph_conv.1} parent=0 // pred_region
    _
  $region33: #{graph_conv.1} parent=0 // pred_fallthru
    _

</llo_original>
